<compile_context>
chip_gen: v5e
topology: v5e:2x2
jax: 0.10.0
libtpu: 0.0.40
codegen_flags: <defaults>
</compile_context>

<pallas_src>
import functools

import jax
import jax.numpy as jnp
from jax import lax
from jax.experimental import pallas as pl
from jax.experimental.pallas import tpu as pltpu


def _contrastive_loss_kernel(z1_ref, z2_ref, part_ref, *,
                             temperature, block_rows):
    inv_t = jnp.float32(1.0 / temperature)
    eps_sq = jnp.float32(1e-24)          # (F.normalize eps = 1e-12) ** 2

    # --- L2 normalization: x * rsqrt(max(||x||^2, eps^2)) -------------------
    def l2_normalize(x):
        x = x.astype(jnp.float32)
        ssq = jnp.sum(x * x, axis=1, keepdims=True)
        return x * lax.rsqrt(jnp.maximum(ssq, eps_sq))

    # Row offset of this program's query block inside the resident key array.
    row0 = pl.multiple_of(pl.program_id(0) * block_rows, 8)

    # Keys: full [B, D] views of z1 / z2 (single resident VMEM window each).
    k1 = l2_normalize(z1_ref[...])
    k2 = l2_normalize(z2_ref[...])
    # Query rows: a [TQ, D] slice of the very same inputs (no second DMA).
    q1 = l2_normalize(z1_ref[pl.ds(row0, block_rows), :])
    q2 = l2_normalize(z2_ref[pl.ds(row0, block_rows), :])

    # Transpose keys once so all matmuls are native [M,K]x[K,N].
    k1t = k1.T                            # [D, B]
    k2t = k2.T                            # [D, B]

    # --- cosine-similarity blocks (MXU, f32 accumulate) ----------------------
    d11 = jnp.dot(q1, k1t, preferred_element_type=jnp.float32)   # [TQ, B]
    d12 = jnp.dot(q1, k2t, preferred_element_type=jnp.float32)
    d21 = jnp.dot(q2, k1t, preferred_element_type=jnp.float32)
    d22 = jnp.dot(q2, k2t, preferred_element_type=jnp.float32)

    # Constant stabilizer m = 1/T (logits <= 1/T after normalization):
    #   exp(sim - m) = exp((dot - 1) * inv_t)
    # Assumes temperature is not pathologically small (> ~0.025) so the
    # positive-pair term exp((cos - 1)/T) never underflows to 0 in f32.
    e11 = jnp.exp((d11 - 1.0) * inv_t)
    e12 = jnp.exp((d12 - 1.0) * inv_t)
    e21 = jnp.exp((d21 - 1.0) * inv_t)
    e22 = jnp.exp((d22 - 1.0) * inv_t)

    # Self-similarity (diagonal) mask, applied only to the same-view blocks,
    # with a single [TQ, B] iota pair shared by both.
    qrow = lax.broadcasted_iota(jnp.int32, e11.shape, 0)
    kcol = lax.broadcasted_iota(jnp.int32, e11.shape, 1)
    diag = kcol == qrow + row0
    zero = jnp.float32(0.0)
    e11 = jnp.where(diag, zero, e11)
    e22 = jnp.where(diag, zero, e22)

    # Per-row logsumexp for the 2*TQ global rows this program covers.
    lse1 = inv_t + jnp.log(jnp.sum(e11, axis=1, keepdims=True)
                           + jnp.sum(e12, axis=1, keepdims=True))   # [TQ, 1]
    lse2 = inv_t + jnp.log(jnp.sum(e21, axis=1, keepdims=True)
                           + jnp.sum(e22, axis=1, keepdims=True))   # [TQ, 1]

    # Positive logit sim[i, label_i] = cos(z1[i], z2[i]) / T; identical for
    # both halves -> no gather, no concatenation.
    pos = jnp.sum(q1 * q2, axis=1, keepdims=True) * inv_t           # [TQ, 1]

    partial = jnp.sum(lse1 + lse2 - 2.0 * pos)                      # scalar

    # Lane-dense, unmasked [1,8,128] store of the per-block partial sum; the
    # host reads element [0,0] of each slab and finishes the mean.
    part_ref[...] = jnp.full(part_ref.shape, partial, dtype=jnp.float32)


def _pick_block_rows(b):
    """Row-block size: multiple of 8 dividing b, or b itself (small batches)."""
    if b <= 256:
        return b
    for tq in (256, 128, 64, 32, 16, 8):
        if b % tq == 0:
            return tq
    return b


def contrastive_loss(z1, z2, temperature=0.07):
    """Pallas implementation of ContrastiveLoss.forward(z1, z2) -> scalar."""
    b, d = z1.shape
    assert z2.shape == (b, d)

    tq = _pick_block_rows(b)
    nb = b // tq

    kernel = functools.partial(
        _contrastive_loss_kernel,
        temperature=float(temperature),
        block_rows=tq,
    )

    # Explicit scoped-VMEM limit (v5e defaults to 16 MiB): 2 resident input
    # windows (double-buffered) + f32 normalized/transposed keys + query rows
    # + 4 similarity/exp blocks + headroom, then clamped to [32, 48] MiB.
    in_bytes = jnp.dtype(z1.dtype).itemsize
    est = (2 * 2 * b * d * in_bytes      # input VMEM windows (x2 buffers)
           + 4 * b * d * 4               # k1, k2, k1t, k2t (f32)
           + 2 * tq * d * 4              # q1, q2 (f32)
           + 8 * tq * b * 4              # d?? and e?? blocks (f32)
           + (1 << 20))
    vmem_limit = int(min(max(2 * est, 32 << 20), 48 << 20))

    partials = pl.pallas_call(
        kernel,
        out_shape=jax.ShapeDtypeStruct((nb, 8, 128), jnp.float32),
        grid=(nb,),
        in_specs=[
            pl.BlockSpec((b, d), lambda i: (0, 0)),    # z1 (resident keys)
            pl.BlockSpec((b, d), lambda i: (0, 0)),    # z2 (resident keys)
        ],
        out_specs=pl.BlockSpec((1, 8, 128), lambda i: (i, 0, 0)),
        compiler_params=pltpu.CompilerParams(
            dimension_semantics=("parallel",),
            vmem_limit_bytes=vmem_limit,
        ),
    )(z1, z2)

    # Mean over the 2B rows of (logsumexp - positive_logit).
    return jnp.sum(partials[:, 0, 0]) / jnp.float32(2 * b)


def _reference_loss(z1, z2, temperature=0.07):
    # Pure-JAX reference mirroring the PyTorch forward, for verification.
    z1 = z1.astype(jnp.float32)
    z2 = z2.astype(jnp.float32)
    z1n = z1 / jnp.maximum(jnp.linalg.norm(z1, axis=1, keepdims=True), 1e-12)
    z2n = z2 / jnp.maximum(jnp.linalg.norm(z2, axis=1, keepdims=True), 1e-12)
    emb = jnp.concatenate([z1n, z2n], axis=0)
    sim = (emb @ emb.T) / temperature
    n = sim.shape[0]
    sim = jnp.where(jnp.eye(n, dtype=bool), -jnp.inf, sim)
    b = z1.shape[0]
    labels = jnp.concatenate([jnp.arange(b) + b, jnp.arange(b)])
    lse = jax.scipy.special.logsumexp(sim, axis=1)
    pos = sim[jnp.arange(n), labels]
    return jnp.mean(lse - pos)


if __name__ == "__main__":
    # ContrastiveLoss has no learned parameters; temperature=0.07 (default).
    key = jax.random.PRNGKey(0)
    k1, k2 = jax.random.split(key)
    batch, feat = 8, 128   # small, TPU tile-friendly embedding shapes
    z1 = jax.random.normal(k1, (batch, feat), dtype=jnp.float32)
    z2 = jax.random.normal(k2, (batch, feat), dtype=jnp.float32)

    loss = jax.jit(contrastive_loss)(z1, z2)
    loss = jax.block_until_ready(loss)

    ref = _reference_loss(z1, z2)
    assert jnp.isfinite(loss), "kernel produced non-finite loss"
    assert jnp.allclose(loss, ref, rtol=1e-4, atol=1e-4), (loss, ref)

    print("KERNEL_OK")
</pallas_src>

<mosaic_0001>
module attributes {stable_mosaic.version = 11 : i64} {
  func.func @_contrastive_loss_kernel(%arg0: i32, %arg1: memref<8x128xf32, #tpu.memory_space<vmem>>, %arg2: memref<8x128xf32, #tpu.memory_space<vmem>>, %arg3: memref<1x8x128xf32, #tpu.memory_space<vmem>>) attributes {dimension_semantics = [#tpu.dimension_semantics<parallel>], iteration_bounds = array<i64: 1>, scalar_prefetch = 0 : i64, scratch_operands = 0 : i64, tpu.core_type = #tpu.core_type<tc>, window_params = [{pipeline_mode = #tpu.pipeline_mode<synchronous>, transform_indices = @transform_0, window_bounds = array<i64: 8, 128>}, {pipeline_mode = #tpu.pipeline_mode<synchronous>, transform_indices = @transform_1, window_bounds = array<i64: 8, 128>}, {transform_indices = @transform_2, window_bounds = array<i64: 1, 8, 128>}]} {
    %c8_i32 = arith.constant 8 : i32
    %0 = arith.muli %arg0, %c8_i32 : i32
    %1 = tpu.assume_multiple %0, 8 : i32
    %c0 = arith.constant 0 : index
    %c0_0 = arith.constant 0 : index
    %2 = vector.load %arg1[%c0, %c0_0] : memref<8x128xf32, #tpu.memory_space<vmem>>, vector<8x128xf32>
    %3 = arith.mulf %2, %2 : vector<8x128xf32>
    %cst = arith.constant dense<0.000000e+00> : vector<8xf32>
    %4 = vector.multi_reduction <add>, %3, %cst [1] : vector<8x128xf32> to vector<8xf32>
    %5 = vector.shape_cast %4 : vector<8xf32> to vector<8x1xf32>
    %cst_1 = arith.constant 1.000000e-24 : f32
    %6 = vector.broadcast %cst_1 : f32 to vector<8x1xf32>
    %7 = arith.maximumf %5, %6 : vector<8x1xf32>
    %8 = math.rsqrt %7 : vector<8x1xf32>
    %9 = vector.broadcast %8 : vector<8x1xf32> to vector<8x128xf32>
    %10 = arith.mulf %2, %9 : vector<8x128xf32>
    %c0_2 = arith.constant 0 : index
    %c0_3 = arith.constant 0 : index
    %11 = vector.load %arg2[%c0_2, %c0_3] : memref<8x128xf32, #tpu.memory_space<vmem>>, vector<8x128xf32>
    %12 = arith.mulf %11, %11 : vector<8x128xf32>
    %cst_4 = arith.constant dense<0.000000e+00> : vector<8xf32>
    %13 = vector.multi_reduction <add>, %12, %cst_4 [1] : vector<8x128xf32> to vector<8xf32>
    %14 = vector.shape_cast %13 : vector<8xf32> to vector<8x1xf32>
    %cst_5 = arith.constant 1.000000e-24 : f32
    %15 = vector.broadcast %cst_5 : f32 to vector<8x1xf32>
    %16 = arith.maximumf %14, %15 : vector<8x1xf32>
    %17 = math.rsqrt %16 : vector<8x1xf32>
    %18 = vector.broadcast %17 : vector<8x1xf32> to vector<8x128xf32>
    %19 = arith.mulf %11, %18 : vector<8x128xf32>
    %20 = arith.index_cast %1 : i32 to index
    %c0_6 = arith.constant 0 : index
    %21 = vector.load %arg1[%20, %c0_6] : memref<8x128xf32, #tpu.memory_space<vmem>>, vector<8x128xf32>
    %22 = arith.mulf %21, %21 : vector<8x128xf32>
    %cst_7 = arith.constant dense<0.000000e+00> : vector<8xf32>
    %23 = vector.multi_reduction <add>, %22, %cst_7 [1] : vector<8x128xf32> to vector<8xf32>
    %24 = vector.shape_cast %23 : vector<8xf32> to vector<8x1xf32>
    %cst_8 = arith.constant 1.000000e-24 : f32
    %25 = vector.broadcast %cst_8 : f32 to vector<8x1xf32>
    %26 = arith.maximumf %24, %25 : vector<8x1xf32>
    %27 = math.rsqrt %26 : vector<8x1xf32>
    %28 = vector.broadcast %27 : vector<8x1xf32> to vector<8x128xf32>
    %29 = arith.mulf %21, %28 : vector<8x128xf32>
    %30 = arith.index_cast %1 : i32 to index
    %c0_9 = arith.constant 0 : index
    %31 = vector.load %arg2[%30, %c0_9] : memref<8x128xf32, #tpu.memory_space<vmem>>, vector<8x128xf32>
    %32 = arith.mulf %31, %31 : vector<8x128xf32>
    %cst_10 = arith.constant dense<0.000000e+00> : vector<8xf32>
    %33 = vector.multi_reduction <add>, %32, %cst_10 [1] : vector<8x128xf32> to vector<8xf32>
    %34 = vector.shape_cast %33 : vector<8xf32> to vector<8x1xf32>
    %cst_11 = arith.constant 1.000000e-24 : f32
    %35 = vector.broadcast %cst_11 : f32 to vector<8x1xf32>
    %36 = arith.maximumf %34, %35 : vector<8x1xf32>
    %37 = math.rsqrt %36 : vector<8x1xf32>
    %38 = vector.broadcast %37 : vector<8x1xf32> to vector<8x128xf32>
    %39 = arith.mulf %31, %38 : vector<8x128xf32>
    %40 = tpu.transpose %10, [1, 0] : vector<8x128xf32> -> vector<128x8xf32>
    %41 = tpu.transpose %19, [1, 0] : vector<8x128xf32> -> vector<128x8xf32>
    %cst_12 = arith.constant dense<0.000000e+00> : vector<8x8xf32>
    %42 = tpu.matmul %29, %40, %cst_12 {dimension_numbers = #tpu.dot_dimension_numbers<[1], [0], [0], [1], [0, 0, 1, 1], [], []>} : vector<8x128xf32>, vector<128x8xf32>, vector<8x8xf32> -> vector<8x8xf32>
    %cst_13 = arith.constant dense<0.000000e+00> : vector<8x8xf32>
    %43 = tpu.matmul %29, %41, %cst_13 {dimension_numbers = #tpu.dot_dimension_numbers<[1], [0], [0], [1], [0, 0, 1, 1], [], []>} : vector<8x128xf32>, vector<128x8xf32>, vector<8x8xf32> -> vector<8x8xf32>
    %cst_14 = arith.constant dense<0.000000e+00> : vector<8x8xf32>
    %44 = tpu.matmul %39, %40, %cst_14 {dimension_numbers = #tpu.dot_dimension_numbers<[1], [0], [0], [1], [0, 0, 1, 1], [], []>} : vector<8x128xf32>, vector<128x8xf32>, vector<8x8xf32> -> vector<8x8xf32>
    %cst_15 = arith.constant dense<0.000000e+00> : vector<8x8xf32>
    %45 = tpu.matmul %39, %41, %cst_15 {dimension_numbers = #tpu.dot_dimension_numbers<[1], [0], [0], [1], [0, 0, 1, 1], [], []>} : vector<8x128xf32>, vector<128x8xf32>, vector<8x8xf32> -> vector<8x8xf32>
    %cst_16 = arith.constant 1.000000e+00 : f32
    %46 = vector.broadcast %cst_16 : f32 to vector<8x8xf32>
    %47 = arith.subf %42, %46 : vector<8x8xf32>
    %cst_17 = arith.constant 14.2857141 : f32
    %48 = vector.broadcast %cst_17 : f32 to vector<8x8xf32>
    %49 = arith.mulf %47, %48 : vector<8x8xf32>
    %50 = math.exp %49 : vector<8x8xf32>
    %cst_18 = arith.constant 1.000000e+00 : f32
    %51 = vector.broadcast %cst_18 : f32 to vector<8x8xf32>
    %52 = arith.subf %43, %51 : vector<8x8xf32>
    %cst_19 = arith.constant 14.2857141 : f32
    %53 = vector.broadcast %cst_19 : f32 to vector<8x8xf32>
    %54 = arith.mulf %52, %53 : vector<8x8xf32>
    %55 = math.exp %54 : vector<8x8xf32>
    %cst_20 = arith.constant 1.000000e+00 : f32
    %56 = vector.broadcast %cst_20 : f32 to vector<8x8xf32>
    %57 = arith.subf %44, %56 : vector<8x8xf32>
    %cst_21 = arith.constant 14.2857141 : f32
    %58 = vector.broadcast %cst_21 : f32 to vector<8x8xf32>
    %59 = arith.mulf %57, %58 : vector<8x8xf32>
    %60 = math.exp %59 : vector<8x8xf32>
    %cst_22 = arith.constant 1.000000e+00 : f32
    %61 = vector.broadcast %cst_22 : f32 to vector<8x8xf32>
    %62 = arith.subf %45, %61 : vector<8x8xf32>
    %cst_23 = arith.constant 14.2857141 : f32
    %63 = vector.broadcast %cst_23 : f32 to vector<8x8xf32>
    %64 = arith.mulf %62, %63 : vector<8x8xf32>
    %65 = math.exp %64 : vector<8x8xf32>
    %66 = tpu.iota {dimensions = array<i32: 0>} : vector<8x8xi32>
    %67 = tpu.iota {dimensions = array<i32: 1>} : vector<8x8xi32>
    %68 = vector.broadcast %1 : i32 to vector<8x8xi32>
    %69 = arith.addi %66, %68 : vector<8x8xi32>
    %70 = arith.cmpi eq, %67, %69 : vector<8x8xi32>
    %cst_24 = arith.constant 0.000000e+00 : f32
    %71 = vector.broadcast %cst_24 : f32 to vector<8x8xf32>
    %72 = arith.select %70, %71, %50 : vector<8x8xi1>, vector<8x8xf32>
    %cst_25 = arith.constant 0.000000e+00 : f32
    %73 = vector.broadcast %cst_25 : f32 to vector<8x8xf32>
    %74 = arith.select %70, %73, %65 : vector<8x8xi1>, vector<8x8xf32>
    %cst_26 = arith.constant dense<0.000000e+00> : vector<8xf32>
    %75 = vector.multi_reduction <add>, %72, %cst_26 [1] : vector<8x8xf32> to vector<8xf32>
    %76 = vector.shape_cast %75 : vector<8xf32> to vector<8x1xf32>
    %cst_27 = arith.constant dense<0.000000e+00> : vector<8xf32>
    %77 = vector.multi_reduction <add>, %55, %cst_27 [1] : vector<8x8xf32> to vector<8xf32>
    %78 = vector.shape_cast %77 : vector<8xf32> to vector<8x1xf32>
    %79 = arith.addf %76, %78 : vector<8x1xf32>
    %80 = math.log %79 : vector<8x1xf32>
    %cst_28 = arith.constant 14.2857141 : f32
    %81 = vector.broadcast %cst_28 : f32 to vector<8x1xf32>
    %82 = arith.addf %81, %80 : vector<8x1xf32>
    %cst_29 = arith.constant dense<0.000000e+00> : vector<8xf32>
    %83 = vector.multi_reduction <add>, %60, %cst_29 [1] : vector<8x8xf32> to vector<8xf32>
    %84 = vector.shape_cast %83 : vector<8xf32> to vector<8x1xf32>
    %cst_30 = arith.constant dense<0.000000e+00> : vector<8xf32>
    %85 = vector.multi_reduction <add>, %74, %cst_30 [1] : vector<8x8xf32> to vector<8xf32>
    %86 = vector.shape_cast %85 : vector<8xf32> to vector<8x1xf32>
    %87 = arith.addf %84, %86 : vector<8x1xf32>
    %88 = math.log %87 : vector<8x1xf32>
    %cst_31 = arith.constant 14.2857141 : f32
    %89 = vector.broadcast %cst_31 : f32 to vector<8x1xf32>
    %90 = arith.addf %89, %88 : vector<8x1xf32>
    %91 = arith.mulf %29, %39 : vector<8x128xf32>
    %cst_32 = arith.constant dense<0.000000e+00> : vector<8xf32>
    %92 = vector.multi_reduction <add>, %91, %cst_32 [1] : vector<8x128xf32> to vector<8xf32>
    %93 = vector.shape_cast %92 : vector<8xf32> to vector<8x1xf32>
    %cst_33 = arith.constant 14.2857141 : f32
    %94 = vector.broadcast %cst_33 : f32 to vector<8x1xf32>
    %95 = arith.mulf %93, %94 : vector<8x1xf32>
    %96 = arith.addf %82, %90 : vector<8x1xf32>
    %cst_34 = arith.constant 2.000000e+00 : f32
    %97 = vector.broadcast %cst_34 : f32 to vector<8x1xf32>
    %98 = arith.mulf %97, %95 : vector<8x1xf32>
    %99 = arith.subf %96, %98 : vector<8x1xf32>
    %100 = vector.shape_cast %99 : vector<8x1xf32> to vector<1x8x1xf32>
    %cst_35 = arith.constant dense<0.000000e+00> : vector<1xf32>
    %101 = vector.multi_reduction <add>, %100, %cst_35 [1, 2] : vector<1x8x1xf32> to vector<1xf32>
    %102 = vector.shape_cast %101 : vector<1xf32> to vector<1x1x1xf32>
    %103 = vector.extract %102[0, 0, 0] : f32 from vector<1x1x1xf32>
    %104 = vector.broadcast %103 : f32 to vector<1x8x128xf32>
    %c0_36 = arith.constant 0 : index
    %c0_37 = arith.constant 0 : index
    %c0_38 = arith.constant 0 : index
    %105 = vector.load %arg3[%c0_36, %c0_37, %c0_38] : memref<1x8x128xf32, #tpu.memory_space<vmem>>, vector<1x8x128xf32>
    tpu.vector_store %arg3[%c0_36, %c0_37, %c0_38], %104 {strides = array<i32>} : memref<1x8x128xf32, #tpu.memory_space<vmem>>, vector<1x8x128xf32>,
    return
  }
  func.func @transform_0(%arg0: i32) -> (i32, i32) {
    %c0_i32 = arith.constant 0 : i32
    %c0_i32_0 = arith.constant 0 : i32
    %c0_i32_1 = arith.constant 0 : i32
    return %c0_i32, %c0_i32_0 : i32, i32
  }
  func.func @transform_1(%arg0: i32) -> (i32, i32) {
    %c0_i32 = arith.constant 0 : i32
    %c0_i32_0 = arith.constant 0 : i32
    %c0_i32_1 = arith.constant 0 : i32
    return %c0_i32, %c0_i32_0 : i32, i32
  }
  func.func @transform_2(%arg0: i32) -> (i32, i32, i32) {
    %c0_i32 = arith.constant 0 : i32
    %c0_i32_0 = arith.constant 0 : i32
    %c0_i32_1 = arith.constant 0 : i32
    return %arg0, %c0_i32, %c0_i32_0 : i32, i32, i32
  }
}

</mosaic_0001>

<llo_original>
// kernel: contrastive_loss.1
$region0: #{contrastive_loss.1}
  #allocation0 [shape = 'u32[]', space=smem, size = 0x4, offset = 0x4, fixed_abs, tag = 'smem constant byte address 0x4 - core index']
  #allocation1 [shape = 'u32[72,128]{1,0:T(1,128)}', space=vmem, size = 0x9000, scoped, tag = 'internal scratch']
  %s0 = inlined_call_operand.hbm [shape: f32[8,128], index: 0, kind: input, shape index: {}]
  %s1 = inlined_call_operand.hbm [shape: f32[8,128], index: 1, kind: input, shape index: {}]
  %s2 = inlined_call_operand.vmem [shape: f32[1,8,128], index: 2, kind: output, shape index: {}]
  %s3 = sld [smem:[#allocation0]]
  $region26: #{contrastive_loss.1} parent=0
    _
  %s5 = ssub.s32 1, %s3
  %s6 = scalar_select 0, %s5, %s3
  $region1: #{contrastive_loss.1} parent=0
    #allocation2 [shape = 'u8[4096]{0}', space=vmem, size = 0x1000, scoped, tag = 'input window, operand 0, single buffered']
    #allocation3 [shape = 's32[1]{0}', space=sflag, size = 0x4, scoped, tag = 'scoped memory for contrastive_loss.1']
    #allocation4 [shape = 'u8[4096]{0}', space=vmem, size = 0x1000, scoped, tag = 'input window, operand 1, single buffered']
    #allocation5 [shape = 's32[1]{0}', space=sflag, size = 0x4, scoped, tag = 'scoped memory for contrastive_loss.1']
    %7 = vsyncpa [#allocation3], 0
    %8 = vsyncpa [#allocation5], 0
    // Predicated region
    $region2: #{contrastive_loss.1} parent=1 // pred_check
      _
    $region3: #{contrastive_loss.1} parent=1 // pred_check_branch
      %10 = sbr.rel (0) target = $region5
    $region4: #{contrastive_loss.1} parent=1 // pred_region
      %12 = vsyncadd [#allocation3], 0
      %s14 = sshll.u32 %s0, 4
      %s15 = int_to_ptr.hbm [resolvable:$true] %s14
      %s16 = sshll.u32 [#allocation2], 4
      %s17 = int_to_ptr.vmem [resolvable:$true] %s16
      %19 = dma.hbm_to_vmem [thread:$0]  %s15, 128, %s17, [#allocation3]
    $region5: #{contrastive_loss.1} parent=1 // pred_fallthru
      _
    // Predicated region
    $region6: #{contrastive_loss.1} parent=1 // pred_check
      _
    $region7: #{contrastive_loss.1} parent=1 // pred_check_branch
      %21 = sbr.rel (0) target = $region9
    $region8: #{contrastive_loss.1} parent=1 // pred_region
      %23 = vsyncadd [#allocation5], 0
      %s25 = sshll.u32 %s1, 4
      %s26 = int_to_ptr.hbm [resolvable:$true] %s25
      %s27 = sshll.u32 [#allocation4], 4
      %s28 = int_to_ptr.vmem [resolvable:$true] %s27
      %30 = dma.hbm_to_vmem [thread:$0]  %s26, 128, %s28, [#allocation5]
    $region9: #{contrastive_loss.1} parent=1 // pred_fallthru
      _
    // Predicated region
    $region10: #{contrastive_loss.1} parent=1 // pred_check
      _
    $region11: #{contrastive_loss.1} parent=1 // pred_check_branch
      %32 = sbr.rel (0) target = $region13
    $region12: #{contrastive_loss.1} parent=1 // pred_region
      %34 = dma.done [#allocation3], 128
    $region13: #{contrastive_loss.1} parent=1 // pred_fallthru
      _
    // Predicated region
    $region14: #{contrastive_loss.1} parent=1 // pred_check
      _
    $region15: #{contrastive_loss.1} parent=1 // pred_check_branch
      %36 = sbr.rel (0) target = $region17
    $region16: #{contrastive_loss.1} parent=1 // pred_region
      %38 = dma.done [#allocation5], 128
    $region17: #{contrastive_loss.1} parent=1 // pred_fallthru
      _
    %s39 = smul.u32 0, 8
    %v40 = vld [vmem:[#allocation2] sm:$0xff]
    %v41 = vmul.f32 %v40, %v40
    %42 = vadd.xlane.f32.xlu0 %v41
    %v43 = vpop.xlane.xlu0 %42
    %v44 = vmax.f32 %v43, 1e-24
    %v45 = vrsqrt.pop %v44
    %v46 = vmul.f32 %v45, %v44
    %v47 = vmul.f32 %v46, %v45
    %v48 = vmul.f32 0.5, %v47
    %v49 = vsub.f32 1.5, %v48
    %v50 = vmul.f32 %v45, %v49
    %vm51 = vweird.f32 %v44
    %vm52 = vweird.f32 %v45
    %vm53 = vmor %vm51, %vm52
    %v54 = vsel %vm53, %v45, %v50
    %v55 = vmul.f32 %v40, %v54
    %v56 = vld [vmem:[#allocation4] sm:$0xff]
    %v57 = vmul.f32 %v56, %v56
    %58 = vadd.xlane.f32.xlu0 %v57
    %v59 = vpop.xlane.xlu0 %58
    %v60 = vmax.f32 %v59, 1e-24
    %v61 = vrsqrt.pop %v60
    %v62 = vmul.f32 %v61, %v60
    %v63 = vmul.f32 %v62, %v61
    %v64 = vmul.f32 0.5, %v63
    %v65 = vsub.f32 1.5, %v64
    %v66 = vmul.f32 %v61, %v65
    %vm67 = vweird.f32 %v60
    %vm68 = vweird.f32 %v61
    %vm69 = vmor %vm67, %vm68
    %v70 = vsel %vm69, %v61, %v66
    %v71 = vmul.f32 %v56, %v70
    %s72 = scalar_lea.vmem [#allocation2], %s39
    %v73 = vld [vmem:[%s72] sm:$0xff]
    %v74 = vmul.f32 %v73, %v73
    %75 = vadd.xlane.f32.xlu0 %v74
    %v76 = vpop.xlane.xlu0 %75
    %v77 = vmax.f32 %v76, 1e-24
    %v78 = vrsqrt.pop %v77
    %v79 = vmul.f32 %v78, %v77
    %v80 = vmul.f32 %v79, %v78
    %v81 = vmul.f32 0.5, %v80
    %v82 = vsub.f32 1.5, %v81
    %v83 = vmul.f32 %v78, %v82
    %vm84 = vweird.f32 %v77
    %vm85 = vweird.f32 %v78
    %vm86 = vmor %vm84, %vm85
    %v87 = vsel %vm86, %v78, %v83
    %v88 = vmul.f32 %v73, %v87
    %s89 = scalar_lea.vmem [#allocation4], %s39
    %v90 = vld [vmem:[%s89] sm:$0xff]
    %v91 = vmul.f32 %v90, %v90
    %92 = vadd.xlane.f32.xlu0 %v91
    %v93 = vpop.xlane.xlu0 %92
    %v94 = vmax.f32 %v93, 1e-24
    %v95 = vrsqrt.pop %v94
    %v96 = vmul.f32 %v95, %v94
    %v97 = vmul.f32 %v96, %v95
    %v98 = vmul.f32 0.5, %v97
    %v99 = vsub.f32 1.5, %v98
    %v100 = vmul.f32 %v95, %v99
    %vm101 = vweird.f32 %v94
    %vm102 = vweird.f32 %v95
    %vm103 = vmor %vm101, %vm102
    %v104 = vsel %vm103, %v95, %v100
    %v105 = vmul.f32 %v90, %v104
    %106 = vmatpush.xpose.msra.mxu0 0.0
    %107 = vmatpush.xpose.msra.mxu0 0.0
    %108 = vmatpush.xpose.msra.mxu0 0.0
    %109 = vmatpush.xpose.msra.mxu0 0.0
    %110 = vmatpush.xpose.msra.mxu0 0.0
    %111 = vmatpush.xpose.msra.mxu0 0.0
    %112 = vmatpush.xpose.msra.mxu0 0.0
    %113 = vmatpush.xpose.msra.mxu0 0.0
    %114 = vmatpush.xpose.msra.mxu0 0.0
    %115 = vmatpush.xpose.msra.mxu0 0.0
    %116 = vmatpush.xpose.msra.mxu0 0.0
    %117 = vmatpush.xpose.msra.mxu0 0.0
    %118 = vmatpush.xpose.msra.mxu0 0.0
    %119 = vmatpush.xpose.msra.mxu0 0.0
    %120 = vmatpush.xpose.msra.mxu0 0.0
    %121 = vmatpush.xpose.msra.mxu0 %v55
    %122 = vmatmul.f32.gmra.mxu0 %v88
    %v123 = vpop.f32.mrf.mxu0
    %v124 = vadd.f32 0.0, %v123
    %125 = vdwg.mxu0
    %126 = vmatpush.xpose.msra.mxu0 0.0
    %127 = vmatpush.xpose.msra.mxu0 0.0
    %128 = vmatpush.xpose.msra.mxu0 0.0
    %129 = vmatpush.xpose.msra.mxu0 0.0
    %130 = vmatpush.xpose.msra.mxu0 0.0
    %131 = vmatpush.xpose.msra.mxu0 0.0
    %132 = vmatpush.xpose.msra.mxu0 0.0
    %133 = vmatpush.xpose.msra.mxu0 0.0
    %134 = vmatpush.xpose.msra.mxu0 0.0
    %135 = vmatpush.xpose.msra.mxu0 0.0
    %136 = vmatpush.xpose.msra.mxu0 0.0
    %137 = vmatpush.xpose.msra.mxu0 0.0
    %138 = vmatpush.xpose.msra.mxu0 0.0
    %139 = vmatpush.xpose.msra.mxu0 0.0
    %140 = vmatpush.xpose.msra.mxu0 0.0
    %141 = vmatpush.xpose.msra.mxu0 %v71
    %142 = vmatmul.f32.gmra.mxu0 %v88
    %v143 = vpop.f32.mrf.mxu0
    %v144 = vadd.f32 0.0, %v143
    %145 = vdwg.mxu0
    %146 = vmatpush.xpose.msra.mxu0 0.0
    %147 = vmatpush.xpose.msra.mxu0 0.0
    %148 = vmatpush.xpose.msra.mxu0 0.0
    %149 = vmatpush.xpose.msra.mxu0 0.0
    %150 = vmatpush.xpose.msra.mxu0 0.0
    %151 = vmatpush.xpose.msra.mxu0 0.0
    %152 = vmatpush.xpose.msra.mxu0 0.0
    %153 = vmatpush.xpose.msra.mxu0 0.0
    %154 = vmatpush.xpose.msra.mxu0 0.0
    %155 = vmatpush.xpose.msra.mxu0 0.0
    %156 = vmatpush.xpose.msra.mxu0 0.0
    %157 = vmatpush.xpose.msra.mxu0 0.0
    %158 = vmatpush.xpose.msra.mxu0 0.0
    %159 = vmatpush.xpose.msra.mxu0 0.0
    %160 = vmatpush.xpose.msra.mxu0 0.0
    %161 = vmatpush.xpose.msra.mxu0 %v55
    %162 = vmatmul.f32.gmra.mxu0 %v105
    %v163 = vpop.f32.mrf.mxu0
    %v164 = vadd.f32 0.0, %v163
    %165 = vdwg.mxu0
    %166 = vmatpush.xpose.msra.mxu0 0.0
    %167 = vmatpush.xpose.msra.mxu0 0.0
    %168 = vmatpush.xpose.msra.mxu0 0.0
    %169 = vmatpush.xpose.msra.mxu0 0.0
    %170 = vmatpush.xpose.msra.mxu0 0.0
    %171 = vmatpush.xpose.msra.mxu0 0.0
    %172 = vmatpush.xpose.msra.mxu0 0.0
    %173 = vmatpush.xpose.msra.mxu0 0.0
    %174 = vmatpush.xpose.msra.mxu0 0.0
    %175 = vmatpush.xpose.msra.mxu0 0.0
    %176 = vmatpush.xpose.msra.mxu0 0.0
    %177 = vmatpush.xpose.msra.mxu0 0.0
    %178 = vmatpush.xpose.msra.mxu0 0.0
    %179 = vmatpush.xpose.msra.mxu0 0.0
    %180 = vmatpush.xpose.msra.mxu0 0.0
    %181 = vmatpush.xpose.msra.mxu0 %v71
    %182 = vmatmul.f32.gmra.mxu0 %v105
    %v183 = vpop.f32.mrf.mxu0
    %v184 = vadd.f32 0.0, %v183
    %185 = vdwg.mxu0
    %v186 = vsub.f32 %v124, 1.0
    %v187 = vmul.f32 %v186, 14.285714
    %v188 = vmul.f32 %v187, 1.442695
    %v189 = vpow.pop %v188
    %v190 = vsub.f32 %v144, 1.0
    %v191 = vmul.f32 %v190, 14.285714
    %v192 = vmul.f32 %v191, 1.442695
    %v193 = vpow.pop %v192
    %v194 = vsub.f32 %v164, 1.0
    %v195 = vmul.f32 %v194, 14.285714
    %v196 = vmul.f32 %v195, 1.442695
    %v197 = vpow.pop %v196
    %v198 = vsub.f32 %v184, 1.0
    %v199 = vmul.f32 %v198, 14.285714
    %v200 = vmul.f32 %v199, 1.442695
    %v201 = vpow.pop %v200
    %v202 = vlaneseq
    %v203 = vshrl.u32 %v202, 7
    %v204 = vlaneseq
    %v205 = vand.u32 %v204, 127
    %v206 = vstv %s39
    %v207 = vadd.s32 %v203, %v206
    %vm208 = vcmp.eq.s32.totalorder %v205, %v207
    %v209 = vsel %vm208, 0.0, %v189
    %v210 = vsel %vm208, 0.0, %v201
    %vm211 = vcmask 64512
    %v212 = vsel %vm211, %v209, 0.0
    %213 = vadd.xlane.f32.xlu0 %v212
    %v214 = vpop.xlane.xlu0 %213
    %v215 = vsel %vm211, %v193, 0.0
    %216 = vadd.xlane.f32.xlu0 %v215
    %v217 = vpop.xlane.xlu0 %216
    %v218 = vadd.f32 %v214, %v217
    %v219 = vlog2.pop %v218
    %v220 = vmul.f32 %v219, 0.6931472
    %v221 = vadd.f32 %v220, 14.285714
    %v222 = vsel %vm211, %v197, 0.0
    %223 = vadd.xlane.f32.xlu0 %v222
    %v224 = vpop.xlane.xlu0 %223
    %v225 = vsel %vm211, %v210, 0.0
    %226 = vadd.xlane.f32.xlu0 %v225
    %v227 = vpop.xlane.xlu0 %226
    %v228 = vadd.f32 %v224, %v227
    %v229 = vlog2.pop %v228
    %v230 = vmul.f32 %v229, 0.6931472
    %v231 = vadd.f32 %v230, 14.285714
    %v232 = vmul.f32 %v88, %v105
    %233 = vadd.xlane.f32.xlu0 %v232
    %v234 = vpop.xlane.xlu0 %233
    %v235 = vmul.f32 %v234, 14.285714
    %v236 = vadd.f32 %v221, %v231
    %v237 = vmul.f32 %v235, 2.0
    %v238 = vsub.f32 %v236, %v237
    %vm239 = vcmask 7168
    %v240 = vsel %vm239, %v238, 0.0
    %241 = vadd.xlane.f32.xlu0 %v240
    %v242 = vpop.xlane.xlu0 %241
    %v243 = vrot.slane %v242, 4
    %v244 = vadd.f32 %v242, %v243
    %v245 = vrot.slane %v244, 2
    %v246 = vadd.f32 %v244, %v245
    %v247 = vrot.slane %v246, 1
    %v248 = vadd.f32 %v246, %v247
    %s249 = vtos %v248
    %v250 = vstv %s249
    %251 = vst [vmem:[%s2] sm:$0xff] %v250
    // Predicated region
    $region18: #{contrastive_loss.1} parent=1 // pred_check
      _
    $region19: #{contrastive_loss.1} parent=1 // pred_check_branch
      %253 = sbr.rel (0) target = $region21
    $region20: #{contrastive_loss.1} parent=1 // pred_region
      _
    $region21: #{contrastive_loss.1} parent=1 // pred_fallthru
      _
    // Predicated region
    $region22: #{contrastive_loss.1} parent=1 // pred_check
      _
    $region23: #{contrastive_loss.1} parent=1 // pred_check_branch
      %255 = sbr.rel (0) target = $region25
    $region24: #{contrastive_loss.1} parent=1 // pred_region
      _
    $region25: #{contrastive_loss.1} parent=1 // pred_fallthru
      _
    %256 = vsyncpa [#allocation3], 1
    %257 = vsyncpa [#allocation5], 1

</llo_original>
